<compile_context>
chip_gen: v7x
topology: tpu7x:2x2x1
jax: 0.10.0
libtpu: 0.0.40
codegen_flags: <defaults>
</compile_context>

<pallas_src>
import functools

import jax
import jax.numpy as jnp
from jax.experimental import pallas as pl
from jax.experimental.pallas import tpu as pltpu


# ----------------------------------------------------------------------------
# Pallas kernel
# ----------------------------------------------------------------------------
def _broadcast_table_kernel(emb_ref, o_ref):
    # emb_ref: [rows, lanes]       -- whole embedding table (VMEM-resident,
    #                                 constant index_map -> one HBM read total)
    # o_ref:   [TB, rows, lanes]   -- one batch tile per grid step
    o_ref[...] = jnp.broadcast_to(emb_ref[...][None], o_ref.shape)


def _pick_batch_tile(batch_size, bytes_per_batch_elem, target_block_bytes=1 << 20):
    """Choose a batch tile giving ~1 MiB output blocks (85%+ of HBM roofline),
    while keeping >= 2 grid steps when possible (v7x: 2 TensorCores)."""
    tb = max(1, target_block_bytes // max(bytes_per_batch_elem, 1))
    tb = min(tb, batch_size)
    if batch_size >= 2:
        tb = min(tb, (batch_size + 1) // 2)
    # Prefer an evenly dividing tile to avoid a ragged (masked) last block.
    while tb > 1 and batch_size % tb != 0:
        tb -= 1
    return tb


# ----------------------------------------------------------------------------
# Wrapper (forward pass)
# ----------------------------------------------------------------------------
@functools.partial(jax.jit, static_argnums=(2, 3))
def grid_module_forward(x, emb_weight, grid_size, feature_size):
    """out[b] = grid_embedding.weight for every b in [0, x.shape[0]).

    `x` is accepted for API fidelity with the PyTorch module; only its leading
    (batch) dimension influences the result.
    """
    batch_size = x.shape[0]
    g2 = grid_size * grid_size
    assert emb_weight.shape == (g2, feature_size), emb_weight.shape

    dtype = emb_weight.dtype
    itemsize = jnp.dtype(dtype).itemsize
    total = g2 * feature_size

    # Lane-dense layout: row-major flatten to (rows, 128) when possible.
    if total % 128 == 0:
        lanes, rows = 128, total // 128
    else:
        # Fallback: keep the native layout (last two dims = full array extent).
        lanes, rows = feature_size, g2
    emb2d = emb_weight.reshape(rows, lanes)  # row-major reshape: zero data movement

    tb = _pick_batch_tile(batch_size, total * itemsize)
    num_steps = pl.cdiv(batch_size, tb)

    out_flat = pl.pallas_call(
        _broadcast_table_kernel,
        out_shape=jax.ShapeDtypeStruct((batch_size, rows, lanes), dtype),
        grid_spec=pl.GridSpec(
            grid=(num_steps,),
            in_specs=[
                # Full-extent block, constant index_map -> table is DMA'd from
                # HBM once and stays resident in VMEM across all batch steps.
                pl.BlockSpec(
                    (rows, lanes),
                    lambda b: (0, 0),
                    memory_space=pltpu.MemorySpace.VMEM,
                ),
            ],
            # Lane-dense (128-wide) unmasked stores, ~1 MiB per writeback DMA.
            out_specs=pl.BlockSpec((tb, rows, lanes), lambda b: (b, 0, 0)),
        ),
        compiler_params=pltpu.CompilerParams(
            dimension_semantics=("parallel",),
        ),
    )(emb2d)

    return out_flat.reshape(batch_size, g2, feature_size)


# ----------------------------------------------------------------------------
# Demo / self-check
# ----------------------------------------------------------------------------
if __name__ == "__main__":
    # Small shapes consistent with the module:
    #   x: [batch, feature_size, feature_map, feature_map]
    batch_size = 2
    feature_size = 32
    feature_map_size = 16
    grid_size = 8  # -> grid_size**2 = 64 embedding rows

    key = jax.random.PRNGKey(0)
    kx, ke = jax.random.split(key)
    x = jax.random.normal(
        kx, (batch_size, feature_size, feature_map_size, feature_map_size), jnp.float32
    )
    # nn.Embedding default init: N(0, 1)
    emb_weight = jax.random.normal(
        ke, (grid_size * grid_size, feature_size), jnp.float32
    )

    y = grid_module_forward(x, emb_weight, grid_size, feature_size)
    y = jax.block_until_ready(y)

    assert y.shape == (batch_size, grid_size * grid_size, feature_size), y.shape
    # Pure-JAX reference of the module's semantics: table broadcast over batch.
    ref = jnp.broadcast_to(emb_weight[None], y.shape)
    assert bool(jnp.all(jnp.isfinite(y)))
    assert bool(jnp.allclose(y, ref))
    print("KERNEL_OK")
</pallas_src>

<mosaic_0001>
module attributes {stable_mosaic.version = 11 : i64} {
  func.func @_broadcast_table_kernel(%arg0: i32, %arg1: memref<16x128xf32, #tpu.memory_space<vmem>>, %arg2: memref<1x16x128xf32, #tpu.memory_space<vmem>>) attributes {dimension_semantics = [#tpu.dimension_semantics<parallel>], iteration_bounds = array<i64: 2>, scalar_prefetch = 0 : i64, scratch_operands = 0 : i64, tpu.core_type = #tpu.core_type<tc>, window_params = [{pipeline_mode = #tpu.pipeline_mode<synchronous>, transform_indices = @transform_0, window_bounds = array<i64: 16, 128>}, {transform_indices = @transform_1, window_bounds = array<i64: 1, 16, 128>}]} {
    %c0 = arith.constant 0 : index
    %c0_0 = arith.constant 0 : index
    %0 = vector.load %arg1[%c0, %c0_0] : memref<16x128xf32, #tpu.memory_space<vmem>>, vector<16x128xf32>
    %1 = vector.shape_cast %0 : vector<16x128xf32> to vector<1x16x128xf32>
    %c0_1 = arith.constant 0 : index
    %c0_2 = arith.constant 0 : index
    %c0_3 = arith.constant 0 : index
    %2 = vector.load %arg2[%c0_1, %c0_2, %c0_3] : memref<1x16x128xf32, #tpu.memory_space<vmem>>, vector<1x16x128xf32>
    tpu.vector_store %arg2[%c0_1, %c0_2, %c0_3], %1 {strides = array<i32>} : memref<1x16x128xf32, #tpu.memory_space<vmem>>, vector<1x16x128xf32>,
    return
  }
  func.func @transform_0(%arg0: i32) -> (i32, i32) {
    %c0_i32 = arith.constant 0 : i32
    %c0_i32_0 = arith.constant 0 : i32
    %c0_i32_1 = arith.constant 0 : i32
    return %c0_i32, %c0_i32_0 : i32, i32
  }
  func.func @transform_1(%arg0: i32) -> (i32, i32, i32) {
    %c0_i32 = arith.constant 0 : i32
    %c0_i32_0 = arith.constant 0 : i32
    %c0_i32_1 = arith.constant 0 : i32
    return %arg0, %c0_i32, %c0_i32_0 : i32, i32, i32
  }
}

</mosaic_0001>

<llo_original>
// kernel: grid_module_forward.1
$region0: #{grid_module_forward.1}
  #allocation0 [shape = 'u32[]', space=smem, size = 0x4, offset = 0x4, fixed_abs, tag = 'smem constant byte address 0x4 - core index']
  #allocation1 [shape = 'u32[144,128]{1,0:T(1,128)}', space=vmem, size = 0x12000, scoped, tag = 'internal scratch']
  %s0 = inlined_call_operand.vmem [shape: f32[16,128], index: 0, kind: input, shape index: {}]
  %s1 = inlined_call_operand.vmem [shape: f32[2,16,128], index: 1, kind: output, shape index: {}]
  %s2 = sld [smem:[#allocation0]]
  $region37: #{grid_module_forward.1} parent=0
    _
  %s4 = ssub.s32 1, %s2
  %s5 = scalar_select 0, %s4, %s2
  loop: start=0, step=1, limit=4
  $region2: #{grid_module_forward.1} parent=0 // loop_pre_header
    _
  $region3: #{grid_module_forward.1} parent=0 // loop_header
    %s7 = sphi 0, %s11
    %p8 = scmp.ge.s32.totalorder %s7, 4
    %s15 = sphi 0, %s15
    %s17 = sphi 0, %s15
    %s18 = sphi 0, %s17
    %s32 = sphi 0, %s18
    %s38 = sphi 0, %s40
    %s41 = sphi 0, %s38
    %s42 = sphi 0, %s41
    %s58 = sphi 0, %s42
  $region4: #{grid_module_forward.1} parent=0 // loop_header_branch
    %10 = sbr.rel (%p8) target = $region8
  $region5: #{grid_module_forward.1} parent=0 // loop_body
    %s12 = ssub.s32 %s7, 1
    %s13 = ssub.s32 %s7, 2
    %s14 = sadd.s32 %s7, 1
    %s16 = sadd.s32 %s15, 1
    %p19 = scmp.eq.s32.totalorder %s7, 1
    %p20 = scmp.ne.s32.totalorder %s15, %s17
    %p21 = scmp.eq.s32.totalorder %s7, 0
    %p22 = por %p20, %p21
    %p23 = scmp.ne.s32.totalorder %s15, %s17
    %p24 = scmp.eq.s32.totalorder %s12, 1
    %p25 = por %p23, %p24
    %p26 = scmp.ne.s32.totalorder %s17, %s18
    %p27 = scmp.eq.s32.totalorder %s12, 0
    %p28 = por %p26, %p27
    %p29 = scmp.ne.s32.totalorder %s17, %s18
    %p30 = scmp.eq.s32.totalorder %s13, 1
    %p31 = por %p29, %p30
    %p33 = scmp.ne.s32.totalorder %s18, %s32
    %p34 = scmp.eq.s32.totalorder %s13, 0
    %p35 = por %p33, %p34
    %s36 = ssub.s32 %s7, %s14
    %p37 = scmp.eq.s32.totalorder %s36, 0
    %s39 = sadd.s32 %s38, 1
    %s40 = scalar_select %p37, %s38, %s39
    %p43 = pneg %p37
    %p44 = scmp.eq.s32.totalorder %s7, 1
    %p45 = por %p43, %p44
    %p46 = scmp.ne.s32.totalorder %s38, %s41
    %p47 = scmp.eq.s32.totalorder %s7, 0
    %p48 = por %p46, %p47
    %p49 = scmp.ne.s32.totalorder %s38, %s41
    %p50 = scmp.eq.s32.totalorder %s12, 1
    %p51 = por %p49, %p50
    %p52 = scmp.ne.s32.totalorder %s41, %s42
    %p53 = scmp.eq.s32.totalorder %s12, 0
    %p54 = por %p52, %p53
    %p55 = scmp.ne.s32.totalorder %s41, %s42
    %p56 = scmp.eq.s32.totalorder %s13, 1
    %p57 = por %p55, %p56
    %p59 = scmp.ne.s32.totalorder %s42, %s58
    %p60 = scmp.eq.s32.totalorder %s13, 0
    %p61 = por %p59, %p60
    %p62 = scmp.le.s32.totalorder 1, %s7
    %p63 = scmp.lt.s32.totalorder %s7, 3
    %p64 = pnand %p62, %p63
    %p65 = pneg %p64
    // Predicated region
    $region9: #{grid_module_forward.1} parent=5 // pred_check
      _
    $region10: #{grid_module_forward.1} parent=5 // pred_check_branch
      %67 = sbr.rel (%p64) target = $region12
    $region11: #{grid_module_forward.1} parent=5 // pred_region
      %s68 = ssub.s32 %s7, 1
      // Predicated region
      $region13: #{grid_module_forward.1} parent=11 // pred_check
        %p69 = pneg %p28
      $region14: #{grid_module_forward.1} parent=11 // pred_check_branch
        %71 = sbr.rel (%p69) target = $region16
      $region15: #{grid_module_forward.1} parent=11 // pred_region
        _
      $region16: #{grid_module_forward.1} parent=11 // pred_fallthru
        _
    $region12: #{grid_module_forward.1} parent=5 // pred_fallthru
      _
    %p72 = scmp.lt.s32.totalorder %s7, 2
    // Predicated region
    $region17: #{grid_module_forward.1} parent=5 // pred_check
      %p73 = pneg %p72
    $region18: #{grid_module_forward.1} parent=5 // pred_check_branch
      %75 = sbr.rel (%p73) target = $region20
    $region19: #{grid_module_forward.1} parent=5 // pred_region
      _
    $region20: #{grid_module_forward.1} parent=5 // pred_fallthru
      _
    %p76 = scmp.le.s32.totalorder 1, %s7
    %p77 = scmp.lt.s32.totalorder %s7, 3
    %p78 = pnand %p76, %p77
    %p79 = pneg %p78
    // Predicated region
    $region21: #{grid_module_forward.1} parent=5 // pred_check
      _
    $region22: #{grid_module_forward.1} parent=5 // pred_check_branch
      %81 = sbr.rel (%p78) target = $region24
    $region23: #{grid_module_forward.1} parent=5 // pred_region
      %s82 = ssub.s32 %s7, 1
      %p83 = pneg %p28
      %p84 = pneg %p25
      %p85 = pneg %p54
      %p86 = pneg %p51
      %p87 = scmp.lt.s32.totalorder %s12, 1
      %s88 = scalar_select %p87, %s12, 1
      %s89 = smul.addr %s88, 2
      %s90 = smul.addr %s89, 8
      %s91 = scalar_lea.vmem %s1, %s90
      %p92 = scmp.lt.s32.totalorder %s12, 1
      %s93 = scalar_select %p92, %s12, 1
      %s94 = smul.addr %s93, 2
      %s95 = smul.addr %s94, 8
      %s96 = scalar_lea.vmem %s1, %s95
      %v97 = vld [vmem:[%s0] sm:$0xff]
      %v98 = vld [vmem:[%s0 + $0x8] sm:$0xff]
      %99 = vst [vmem:[%s96] sm:$0xff] %v97
      %100 = vst [vmem:[%s96 + $0x8] sm:$0xff] %v98
      %p101 = scmp.lt.s32.totalorder %s12, 1
      %s102 = scalar_select %p101, %s12, 1
      %s103 = smul.addr %s102, 2
      %s104 = smul.addr %s103, 8
      %s105 = scalar_lea.vmem %s1, %s104
      // Predicated region
      $region25: #{grid_module_forward.1} parent=23 // pred_check
        %p106 = pneg %p51
      $region26: #{grid_module_forward.1} parent=23 // pred_check_branch
        %108 = sbr.rel (%p106) target = $region28
      $region27: #{grid_module_forward.1} parent=23 // pred_region
        _
      $region28: #{grid_module_forward.1} parent=23 // pred_fallthru
        _
    $region24: #{grid_module_forward.1} parent=5 // pred_fallthru
      _
    %p109 = scmp.le.s32.totalorder 2, %s7
    // Predicated region
    $region29: #{grid_module_forward.1} parent=5 // pred_check
      %p110 = pneg %p109
    $region30: #{grid_module_forward.1} parent=5 // pred_check_branch
      %112 = sbr.rel (%p110) target = $region32
    $region31: #{grid_module_forward.1} parent=5 // pred_region
      %s113 = ssub.s32 %s7, 2
      // Predicated region
      $region33: #{grid_module_forward.1} parent=31 // pred_check
        %p114 = pneg %p57
      $region34: #{grid_module_forward.1} parent=31 // pred_check_branch
        %116 = sbr.rel (%p114) target = $region36
      $region35: #{grid_module_forward.1} parent=31 // pred_region
        %p117 = scmp.lt.s32.totalorder %s13, 1
        %s118 = scalar_select %p117, %s13, 1
        %s119 = smul.addr %s118, 2
        %s120 = smul.addr %s119, 8
        %s121 = scalar_lea.vmem %s1, %s120
      $region36: #{grid_module_forward.1} parent=31 // pred_fallthru
        _
    $region32: #{grid_module_forward.1} parent=5 // pred_fallthru
      _
  $region6: #{grid_module_forward.1} parent=0 // loop_footer
    %s11 = sadd.s32 1, %s7
  $region7: #{grid_module_forward.1} parent=0 // loop_footer_branch
    %6 = sbr.rel target = $region3
  $region8: #{grid_module_forward.1} parent=0 // loop_exit
    _

</llo_original>
